<compile_context>
chip_gen: v7x
topology: tpu7x:2x2x1
jax: 0.10.0
libtpu: 0.0.40
codegen_flags: <defaults>
</compile_context>

<pallas_src>
import functools

import jax
import jax.numpy as jnp
from jax.experimental import pallas as pl
from jax.experimental.pallas import tpu as pltpu

_MAX_TM = 1024   # rows per tile cap (amortizes the ~0.35 us per-grid-step overhead)
_MIN_TM = 8
_F32_TEMPS = 6   # ~full-tile f32 intermediates live inside the kernel body


def _distill_kl_kernel(ys_ref, yt_ref, out_ref, *, inv_t: float):
    """Per-row sum_c p_t * (log p_t - log p_s) for temperature-softened logits."""
    ys = ys_ref[...].astype(jnp.float32) * inv_t
    yt = yt_ref[...].astype(jnp.float32) * inv_t

    # Student log-partition (numerically stable).
    ys_max = jnp.max(ys, axis=1, keepdims=True)
    ys_shift = ys - ys_max
    log_z_s = jnp.log(jnp.sum(jnp.exp(ys_shift), axis=1, keepdims=True))

    # Teacher exponentials / partition (numerically stable).
    yt_max = jnp.max(yt, axis=1, keepdims=True)
    yt_shift = yt - yt_max
    exp_t = jnp.exp(yt_shift)
    z_t = jnp.sum(exp_t, axis=1, keepdims=True)
    log_z_t = jnp.log(z_t)

    # sum_c p_t * (log p_t - log p_s)
    #   = (1/z_t) * sum_c exp_t * (yt_shift - ys_shift) - (log z_t - log z_s)
    weighted = jnp.sum(exp_t * (yt_shift - ys_shift), axis=1, keepdims=True)
    inv_z_t = pl.reciprocal(z_t)  # per-row scalar; exact keeps tight accuracy
    out_ref[...] = weighted * inv_z_t - (log_z_t - log_z_s)


def _round_up(x: int, m: int) -> int:
    return ((x + m - 1) // m) * m


def _vmem_budgets():
    """(per-step VMEM footprint budget, vmem_limit_bytes), generation aware."""
    try:
        cap = int(pltpu.get_tpu_info().vmem_capacity_bytes)
    except Exception:
        cap = 64 * 1024 * 1024  # conservative fallback (v7x per-TC VMEM)
    footprint = int(cap * 0.75)   # 96 MiB on v5e/v6e (128 MiB), 48 MiB on v7x (64 MiB)
    vmem_limit = int(cap * 0.85)  # ~108 MiB on v5e/v6e, ~54 MiB on v7x
    return footprint, vmem_limit


def _choose_tm(n: int, c: int, in_itemsize: int, footprint_budget: int) -> int:
    # Per-row VMEM cost: 2 inputs x 2 pipeline buffers (caller dtype) plus
    # ~_F32_TEMPS full-tile f32 intermediates materialized by the kernel body.
    per_row_bytes = 2 * 2 * c * in_itemsize + _F32_TEMPS * c * 4
    tm = footprint_budget // max(per_row_bytes, 1)
    tm = (tm // 8) * 8
    tm = max(_MIN_TM, min(tm, _MAX_TM, _round_up(n, 8)))
    return tm


def _per_row_kl(y_s: jax.Array, y_t: jax.Array, temperature: float,
                tile_rows: int | None = None) -> jax.Array:
    """Returns [N] per-sample KL(p_t || p_s) of the temperature-softened dists."""
    assert y_s.shape == y_t.shape and y_s.ndim == 2
    n, c = y_s.shape
    footprint, vmem_limit = _vmem_budgets()
    if tile_rows is None:
        tm = _choose_tm(n, c, jnp.dtype(y_s.dtype).itemsize, footprint)
    else:
        tm = tile_rows  # test-only override (must be a multiple of 8)

    kernel = functools.partial(_distill_kl_kernel, inv_t=1.0 / float(temperature))
    per_row = pl.pallas_call(
        kernel,
        out_shape=jax.ShapeDtypeStruct((n, 1), jnp.float32),
        grid_spec=pltpu.PrefetchScalarGridSpec(
            num_scalar_prefetch=0,
            grid=(pl.cdiv(n, tm),),
            in_specs=[
                # Block width == full C (no padding copy; Mosaic masks ragged lanes).
                pl.BlockSpec((tm, c), lambda i: (i, 0)),
                pl.BlockSpec((tm, c), lambda i: (i, 0)),
            ],
            out_specs=pl.BlockSpec((tm, 1), lambda i: (i, 0)),
        ),
        compiler_params=pltpu.CompilerParams(
            dimension_semantics=("parallel",),   # rows independent; shard across TCs
            vmem_limit_bytes=vmem_limit,
        ),
    )(y_s, y_t)
    return per_row[:, 0]


def distill_kl(y_s: jax.Array, y_t: jax.Array, temperature: float, is_ca: bool = False):
    """JAX/Pallas equivalent of DistillKL.forward.

    is_ca=False: scalar loss = sum(KL) * T**2 / batch_size
    is_ca=True : per-sample loss [N] = sum_c(KL_elementwise) * T**2

    The kernel is HBM-bandwidth-bound: passing bf16 logits halves its runtime
    (math is upcast to f32 inside the kernel).
    """
    per_row = _per_row_kl(y_s, y_t, temperature)  # [N]
    t2 = float(temperature) ** 2
    if is_ca:
        return per_row * t2
    return jnp.sum(per_row) * t2 / y_s.shape[0]


def _reference(y_s, y_t, temperature, is_ca=False):
    """Pure-JAX reference mirroring the PyTorch code (computed in f32)."""
    y_s = y_s.astype(jnp.float32)
    y_t = y_t.astype(jnp.float32)
    log_p_s = jax.nn.log_softmax(y_s / temperature, axis=1)
    p_t = jax.nn.softmax(y_t / temperature, axis=1)
    kl = p_t * (jnp.log(p_t) - log_p_s)
    if is_ca:
        return (kl * temperature**2).sum(-1)
    return kl.sum() * temperature**2 / y_s.shape[0]


if __name__ == "__main__":
    key = jax.random.PRNGKey(0)
    T = 4.0

    # Case 1: small aligned-ish shape, f32.
    k1, k2 = jax.random.split(key)
    y_s = jax.random.normal(k1, (8, 32), dtype=jnp.float32)
    y_t = jax.random.normal(k2, (8, 32), dtype=jnp.float32)

    loss = jax.block_until_ready(distill_kl(y_s, y_t, T, is_ca=False))
    loss_ca = jax.block_until_ready(distill_kl(y_s, y_t, T, is_ca=True))
    assert jnp.allclose(loss, _reference(y_s, y_t, T, False), atol=2e-5, rtol=1e-4)
    assert jnp.allclose(loss_ca, _reference(y_s, y_t, T, True), atol=2e-5, rtol=1e-4)

    # Case 2: ragged shape (C % 128 != 0, N % 8 != 0) -- no pad copies, masked lanes.
    k3, k4 = jax.random.split(k1)
    y_s2 = jax.random.normal(k3, (10, 40), dtype=jnp.float32)
    y_t2 = jax.random.normal(k4, (10, 40), dtype=jnp.float32)

    loss2 = jax.block_until_ready(distill_kl(y_s2, y_t2, T, is_ca=False))
    loss2_ca = jax.block_until_ready(distill_kl(y_s2, y_t2, T, is_ca=True))
    assert jnp.allclose(loss2, _reference(y_s2, y_t2, T, False), atol=2e-5, rtol=1e-4)
    assert jnp.allclose(loss2_ca, _reference(y_s2, y_t2, T, True), atol=2e-5, rtol=1e-4)

    # Case 3: multi-block grid with a partial tail block (20 rows, TM=8 -> 3 steps,
    # last step masked) to exercise the pad-free batch tiling path explicitly.
    k5, k6 = jax.random.split(k3)
    y_s3 = jax.random.normal(k5, (20, 40), dtype=jnp.float32)
    y_t3 = jax.random.normal(k6, (20, 40), dtype=jnp.float32)
    per_row3 = jax.block_until_ready(_per_row_kl(y_s3, y_t3, T, tile_rows=8))
    ref3 = _reference(y_s3, y_t3, T, True) / (T ** 2)
    assert jnp.allclose(per_row3, ref3, atol=2e-5, rtol=1e-4)

    # Case 4: bf16 inputs (kernel upcasts internally; halves HBM traffic).
    y_s4 = y_s.astype(jnp.bfloat16)
    y_t4 = y_t.astype(jnp.bfloat16)
    loss4 = jax.block_until_ready(distill_kl(y_s4, y_t4, T, is_ca=False))
    assert jnp.allclose(loss4, _reference(y_s4, y_t4, T, False), atol=1e-4, rtol=1e-3)

    print("KERNEL_OK")
</pallas_src>

<mosaic_0001>
module attributes {stable_mosaic.version = 11 : i64} {
  func.func @_distill_kl_kernel(%arg0: i32, %arg1: memref<8x32xf32, #tpu.memory_space<vmem>>, %arg2: memref<8x32xf32, #tpu.memory_space<vmem>>, %arg3: memref<8x1xf32, #tpu.memory_space<vmem>>) attributes {dimension_semantics = [#tpu.dimension_semantics<parallel>], iteration_bounds = array<i64: 1>, scalar_prefetch = 0 : i64, scratch_operands = 0 : i64, tpu.core_type = #tpu.core_type<tc>, window_params = [{transform_indices = @transform_0, window_bounds = array<i64: 8, 32>}, {transform_indices = @transform_1, window_bounds = array<i64: 8, 32>}, {transform_indices = @transform_2, window_bounds = array<i64: 8, 1>}]} {
    %c0 = arith.constant 0 : index
    %c0_0 = arith.constant 0 : index
    %0 = vector.load %arg1[%c0, %c0_0] : memref<8x32xf32, #tpu.memory_space<vmem>>, vector<8x32xf32>
    %cst = arith.constant 2.500000e-01 : f32
    %1 = vector.broadcast %cst : f32 to vector<8x32xf32>
    %2 = arith.mulf %0, %1 : vector<8x32xf32>
    %c0_1 = arith.constant 0 : index
    %c0_2 = arith.constant 0 : index
    %3 = vector.load %arg2[%c0_1, %c0_2] : memref<8x32xf32, #tpu.memory_space<vmem>>, vector<8x32xf32>
    %cst_3 = arith.constant 2.500000e-01 : f32
    %4 = vector.broadcast %cst_3 : f32 to vector<8x32xf32>
    %5 = arith.mulf %3, %4 : vector<8x32xf32>
    %cst_4 = arith.constant dense<0xFF800000> : vector<8xf32>
    %6 = vector.multi_reduction <maximumf>, %2, %cst_4 [1] : vector<8x32xf32> to vector<8xf32>
    %7 = vector.shape_cast %6 : vector<8xf32> to vector<8x1xf32>
    %8 = vector.broadcast %7 : vector<8x1xf32> to vector<8x32xf32>
    %9 = arith.subf %2, %8 : vector<8x32xf32>
    %10 = math.exp %9 : vector<8x32xf32>
    %cst_5 = arith.constant dense<0.000000e+00> : vector<8xf32>
    %11 = vector.multi_reduction <add>, %10, %cst_5 [1] : vector<8x32xf32> to vector<8xf32>
    %12 = vector.shape_cast %11 : vector<8xf32> to vector<8x1xf32>
    %13 = math.log %12 : vector<8x1xf32>
    %cst_6 = arith.constant dense<0xFF800000> : vector<8xf32>
    %14 = vector.multi_reduction <maximumf>, %5, %cst_6 [1] : vector<8x32xf32> to vector<8xf32>
    %15 = vector.shape_cast %14 : vector<8xf32> to vector<8x1xf32>
    %16 = vector.broadcast %15 : vector<8x1xf32> to vector<8x32xf32>
    %17 = arith.subf %5, %16 : vector<8x32xf32>
    %18 = math.exp %17 : vector<8x32xf32>
    %cst_7 = arith.constant dense<0.000000e+00> : vector<8xf32>
    %19 = vector.multi_reduction <add>, %18, %cst_7 [1] : vector<8x32xf32> to vector<8xf32>
    %20 = vector.shape_cast %19 : vector<8xf32> to vector<8x1xf32>
    %21 = math.log %20 : vector<8x1xf32>
    %22 = arith.subf %17, %9 : vector<8x32xf32>
    %23 = arith.mulf %18, %22 : vector<8x32xf32>
    %cst_8 = arith.constant dense<0.000000e+00> : vector<8xf32>
    %24 = vector.multi_reduction <add>, %23, %cst_8 [1] : vector<8x32xf32> to vector<8xf32>
    %25 = vector.shape_cast %24 : vector<8xf32> to vector<8x1xf32>
    %26 = tpu.reciprocal %20 : vector<8x1xf32> -> vector<8x1xf32>
    %27 = arith.mulf %25, %26 : vector<8x1xf32>
    %28 = arith.subf %21, %13 : vector<8x1xf32>
    %29 = arith.subf %27, %28 : vector<8x1xf32>
    %c0_9 = arith.constant 0 : index
    %c0_10 = arith.constant 0 : index
    %30 = vector.load %arg3[%c0_9, %c0_10] : memref<8x1xf32, #tpu.memory_space<vmem>>, vector<8x1xf32>
    tpu.vector_store %arg3[%c0_9, %c0_10], %29 {strides = array<i32>} : memref<8x1xf32, #tpu.memory_space<vmem>>, vector<8x1xf32>,
    return
  }
  func.func @transform_0(%arg0: i32) -> (i32, i32) {
    %c0_i32 = arith.constant 0 : i32
    %c0_i32_0 = arith.constant 0 : i32
    return %arg0, %c0_i32 : i32, i32
  }
  func.func @transform_1(%arg0: i32) -> (i32, i32) {
    %c0_i32 = arith.constant 0 : i32
    %c0_i32_0 = arith.constant 0 : i32
    return %arg0, %c0_i32 : i32, i32
  }
  func.func @transform_2(%arg0: i32) -> (i32, i32) {
    %c0_i32 = arith.constant 0 : i32
    %c0_i32_0 = arith.constant 0 : i32
    return %arg0, %c0_i32 : i32, i32
  }
}

</mosaic_0001>

<llo_original>
// kernel: tpu_custom_call.1
$region0: #{tpu_custom_call.1}
  #allocation0 [shape = 'u32[]', space=smem, size = 0x4, offset = 0x4, fixed_abs, tag = 'smem constant byte address 0x4 - core index']
  #allocation1 [shape = 'u32[144,128]{1,0:T(1,128)}', space=vmem, size = 0x12000, scoped, tag = 'internal scratch']
  %s0 = inlined_call_operand.hbm [shape: f32[8,32], index: 0, kind: input, shape index: {}]
  %s1 = inlined_call_operand.hbm [shape: f32[8,32], index: 1, kind: input, shape index: {}]
  %s2 = inlined_call_operand.vmem [shape: f32[8,1], index: 2, kind: output, shape index: {}]
  %s3 = sld [smem:[#allocation0]]
  $region26: #{tpu_custom_call.1} parent=0
    _
  %s5 = ssub.s32 1, %s3
  %s6 = scalar_select 0, %s5, %s3
  $region1: #{tpu_custom_call.1} parent=0
    #allocation2 [shape = 'u8[4096]{0}', space=vmem, size = 0x1000, scoped, tag = 'input window, operand 0, single buffered']
    #allocation3 [shape = 's32[1]{0}', space=sflag, size = 0x4, scoped, tag = 'scoped memory for tpu_custom_call.1']
    #allocation4 [shape = 'u8[4096]{0}', space=vmem, size = 0x1000, scoped, tag = 'input window, operand 1, single buffered']
    #allocation5 [shape = 's32[1]{0}', space=sflag, size = 0x4, scoped, tag = 'scoped memory for tpu_custom_call.1']
    %7 = vsyncpa [#allocation3], 0
    %8 = vsyncpa [#allocation5], 0
    // Predicated region
    $region2: #{tpu_custom_call.1} parent=1 // pred_check
      _
    $region3: #{tpu_custom_call.1} parent=1 // pred_check_branch
      %10 = sbr.rel (0) target = $region5
    $region4: #{tpu_custom_call.1} parent=1 // pred_region
      %s12 = ssub.s32 128, 128
      %13 = vsyncadd [#allocation3], %s12
      %s15 = sshll.u32 [#allocation2], 4
      %s16 = int_to_ptr.vmem [resolvable:$true] %s15
      %18 = dma.hbm_to_vmem [thread:$0]  %s0, 128, %s16, [#allocation3]
    $region5: #{tpu_custom_call.1} parent=1 // pred_fallthru
      _
    // Predicated region
    $region6: #{tpu_custom_call.1} parent=1 // pred_check
      _
    $region7: #{tpu_custom_call.1} parent=1 // pred_check_branch
      %20 = sbr.rel (0) target = $region9
    $region8: #{tpu_custom_call.1} parent=1 // pred_region
      %s22 = ssub.s32 128, 128
      %23 = vsyncadd [#allocation5], %s22
      %s25 = sshll.u32 [#allocation4], 4
      %s26 = int_to_ptr.vmem [resolvable:$true] %s25
      %28 = dma.hbm_to_vmem [thread:$0]  %s1, 128, %s26, [#allocation5]
    $region9: #{tpu_custom_call.1} parent=1 // pred_fallthru
      _
    // Predicated region
    $region10: #{tpu_custom_call.1} parent=1 // pred_check
      _
    $region11: #{tpu_custom_call.1} parent=1 // pred_check_branch
      %30 = sbr.rel (0) target = $region13
    $region12: #{tpu_custom_call.1} parent=1 // pred_region
      %31 = dma.done [#allocation3], 128
    $region13: #{tpu_custom_call.1} parent=1 // pred_fallthru
      _
    // Predicated region
    $region14: #{tpu_custom_call.1} parent=1 // pred_check
      _
    $region15: #{tpu_custom_call.1} parent=1 // pred_check_branch
      %33 = sbr.rel (0) target = $region17
    $region16: #{tpu_custom_call.1} parent=1 // pred_region
      %34 = dma.done [#allocation5], 128
    $region17: #{tpu_custom_call.1} parent=1 // pred_fallthru
      _
    %v35 = vld [vmem:[#allocation2] sm:$0xff]
    %v36 = vmul.f32 %v35, 0.25
    %v37 = vld [vmem:[#allocation4] sm:$0xff]
    %v38 = vmul.f32 %v37, 0.25
    %vm39 = vcmask 261120
    %v40 = vsel %vm39, %v36, -inf
    %41 = vmax.xlane.f32.xlu0 %v40
    %v42 = vpop.xlane.xlu0 %41
    %v43 = vsub.f32 %v36, %v42
    %v44 = vmul.f32 %v43, 1.442695
    %v45 = vpow.pop %v44
    %v46 = vsel %vm39, %v45, 0.0
    %47 = vadd.xlane.f32.xlu0 %v46
    %v48 = vpop.xlane.xlu0 %47
    %v49 = vlog2.pop %v48
    %v50 = vmul.f32 %v49, 0.6931472
    %v51 = vsel %vm39, %v38, -inf
    %52 = vmax.xlane.f32.xlu0 %v51
    %v53 = vpop.xlane.xlu0 %52
    %v54 = vsub.f32 %v38, %v53
    %v55 = vmul.f32 %v54, 1.442695
    %v56 = vpow.pop %v55
    %v57 = vsel %vm39, %v56, 0.0
    %58 = vadd.xlane.f32.xlu0 %v57
    %v59 = vpop.xlane.xlu0 %58
    %v60 = vlog2.pop %v59
    %v61 = vmul.f32 %v60, 0.6931472
    %v62 = vsub.f32 %v54, %v43
    %v63 = vmul.f32 %v56, %v62
    %v64 = vsel %vm39, %v63, 0.0
    %65 = vadd.xlane.f32.xlu0 %v64
    %v66 = vpop.xlane.xlu0 %65
    %v67 = vrcp.pop %v59
    %v68 = vmul.f32 %v66, %v67
    %v69 = vsub.f32 %v61, %v50
    %v70 = vsub.f32 %v68, %v69
    %vm71 = vcmask 7168
    %72 = vst.msk [vmem:[%s2] sm:$0xff] %vm71, %v70
    // Predicated region
    $region18: #{tpu_custom_call.1} parent=1 // pred_check
      _
    $region19: #{tpu_custom_call.1} parent=1 // pred_check_branch
      %74 = sbr.rel (0) target = $region21
    $region20: #{tpu_custom_call.1} parent=1 // pred_region
      _
    $region21: #{tpu_custom_call.1} parent=1 // pred_fallthru
      _
    // Predicated region
    $region22: #{tpu_custom_call.1} parent=1 // pred_check
      _
    $region23: #{tpu_custom_call.1} parent=1 // pred_check_branch
      %76 = sbr.rel (0) target = $region25
    $region24: #{tpu_custom_call.1} parent=1 // pred_region
      _
    $region25: #{tpu_custom_call.1} parent=1 // pred_fallthru
      _
    %77 = vsyncpa [#allocation3], 1
    %78 = vsyncpa [#allocation5], 1

</llo_original>
